<compile_context>
chip_gen: v5e
topology: v5e:2x2
jax: 0.10.0
libtpu: 0.0.40
codegen_flags: <defaults>
</compile_context>

<pallas_src>
import jax
import jax.numpy as jnp
from jax import lax
from jax.experimental import pallas as pl
from jax.experimental.pallas import tpu as pltpu


def critic_kernel(x_ref, w1_ref, b1_ref, w2_ref, b2_ref, o_ref):
    # x streams from HBM as f32; cast to the MXU dtype here (VPU, in VMEM).
    x = x_ref[...].astype(w1_ref.dtype)
    # fc1 on the MXU, f32 accumulation; bias + ReLU in f32 on the VPU.
    h = jnp.dot(x, w1_ref[...], preferred_element_type=jnp.float32)
    h = jnp.maximum(h + b1_ref[...], 0.0)
    # fc2 (out_features == 1), emitted lane-dense:
    # (1, H) contracted with (tile_b, H) over H  ->  (1, tile_b) row.
    row = lax.dot_general(w2_ref[...], h, (((1,), (1,)), ((), ())),
                          preferred_element_type=jnp.float32)
    o_ref[...] = (row + b2_ref[0, 0]).astype(o_ref.dtype)


def _round_up(n, m):
    return -(-n // m) * m


def _vmem_capacity_bytes(default=64 << 20):
    try:
        return int(pltpu.get_tpu_info().vmem_capacity_bytes)
    except Exception:
        return default


def _choose_tile_b(B, input_dim, hidden_dim, x_bpe, w_bpe, vmem_budget_bytes):
    """Largest batch tile that fits the VMEM budget.

    The output block is (1, tile_b) (lane-dense), so a tile smaller than B must
    be a multiple of 128; tile_b == B (grid=(1,)) is always layout-legal.
    Multiple grid steps are only preferred when the streamed x bytes are large
    enough that DMA/compute overlap and megacore (v7x) sharding pay for the
    fixed per-step pipeline overhead.
    """
    lane = lambda n: _round_up(n, 128)
    # Resident, single-buffered weights: W1 (+ sublane padding) and the two
    # f32 hidden-length rows (b1, w2).
    sub = 16 if w_bpe == 2 else 8
    resident = (_round_up(input_dim, sub) * lane(hidden_dim) * w_bpe
                + 2 * 8 * lane(hidden_dim) * 4)
    avail = max(vmem_budget_bytes - resident, 1 << 20)
    # Per-batch-row cost: double-buffered x row (actual byte size), f32 hidden
    # row (intermediate), double-buffered lane of the f32 (1, tile_b) output.
    per_row = 2 * lane(input_dim) * x_bpe + lane(hidden_dim) * 4 + 2 * 8 * 4
    cap = max(8, avail // per_row)

    # Tiny problem: whole batch resident, single grid step, zero tiling overhead.
    if B <= cap and B * input_dim * x_bpe <= (4 << 20):
        return B

    cands = [t for t in range(128, B, 128) if B % t == 0]
    if B <= cap:
        cands.append(B)
    if not cands:
        return B
    fit = [t for t in cands if t <= cap]
    if not fit:
        return min(cands)
    tile = max(fit)
    # Large problem: prefer >=2 grid steps (DMA overlap + v7x megacore).
    if tile == B:
        multi = [t for t in fit if t < B]
        if multi:
            tile = max(multi)
    return tile


def critic_forward(x, w1_t, b1, w2_row, b2, *, tile_b=None,
                   vmem_budget_bytes=None, x_buffers=2):
    """Critic forward pass: relu(x @ W1 + b1) @ w2 + b2 -> (B, 1).

    x:      (B, input_dim)           f32 (streamed; cast to W1's dtype in-kernel)
    w1_t:   (input_dim, hidden_dim)  fc1 weight, pre-transposed; pre-cast to
                                     bf16 once at init for MXU rate (f32 also ok)
    b1:     (1, hidden_dim)          f32
    w2_row: (1, hidden_dim)          f32 fc2 weight row (out_features == 1)
    b2:     (1, 1)                   f32 scalar (lives in SMEM)
    """
    B, input_dim = x.shape
    in_dim_w, hidden_dim = w1_t.shape
    assert in_dim_w == input_dim, (w1_t.shape, x.shape)

    b1 = b1.astype(jnp.float32).reshape(1, hidden_dim)
    w2_row = w2_row.astype(jnp.float32).reshape(1, hidden_dim)
    b2 = b2.astype(jnp.float32).reshape(1, 1)

    # Pad hidden_dim of the (small, resident) weights to a lane multiple for
    # realistic sizes; zero columns are exact no-ops through ReLU and fc2.
    if hidden_dim > 128 and hidden_dim % 128:
        hpad = _round_up(hidden_dim, 128) - hidden_dim
        w1_t = jnp.pad(w1_t, ((0, 0), (0, hpad)))
        b1 = jnp.pad(b1, ((0, 0), (0, hpad)))
        w2_row = jnp.pad(w2_row, ((0, 0), (0, hpad)))
        hidden_dim += hpad

    x_bpe = x.dtype.itemsize
    w_bpe = w1_t.dtype.itemsize
    capacity = _vmem_capacity_bytes()
    if vmem_budget_bytes is None:
        vmem_budget_bytes = capacity * 3 // 4        # generation-aware budget
    if tile_b is None:
        tile_b = _choose_tile_b(B, input_dim, hidden_dim, x_bpe, w_bpe,
                                vmem_budget_bytes)
    assert B % tile_b == 0, (B, tile_b)
    grid = (B // tile_b,)

    lane = lambda n: _round_up(n, 128)
    sub = 16 if w_bpe == 2 else 8
    vmem_needed = (
        x_buffers * tile_b * lane(input_dim) * x_bpe           # x tiles (pipelined)
        + tile_b * lane(hidden_dim) * 4                        # h intermediate
        + 2 * 8 * lane(tile_b) * 4                             # (1, tile_b) out tiles
        + _round_up(input_dim, sub) * lane(hidden_dim) * w_bpe  # W1 (resident)
        + 2 * 8 * lane(hidden_dim) * 4                         # b1 + w2 rows
    )
    vmem_limit = int(min(max(vmem_needed + (4 << 20), 32 << 20), capacity))

    cost = pl.CostEstimate(
        flops=2 * B * input_dim * hidden_dim + 2 * B * hidden_dim,
        transcendentals=0,
        bytes_accessed=(B * input_dim * x_bpe
                        + input_dim * hidden_dim * w_bpe
                        + 2 * hidden_dim * 4 + 4
                        + B * x.dtype.itemsize),
    )

    const = lambda i: (0, 0)
    if x_buffers == 2:
        x_spec = pl.BlockSpec((tile_b, input_dim), lambda i: (i, 0))
    else:  # sweepable: deeper buffering on the only streamed operand
        x_spec = pl.BlockSpec((tile_b, input_dim), lambda i: (i, 0),
                              pipeline_mode=pl.Buffered(x_buffers))

    out_row = pl.pallas_call(
        critic_kernel,
        out_shape=jax.ShapeDtypeStruct((1, B), x.dtype),
        grid_spec=pltpu.PrefetchScalarGridSpec(
            num_scalar_prefetch=0,
            grid=grid,
            in_specs=[
                x_spec,                                                  # x tile (f32 stream)
                pl.BlockSpec((input_dim, hidden_dim), const,
                             pipeline_mode=pl.Buffered(1)),              # W1 (resident)
                pl.BlockSpec((1, hidden_dim), const,
                             pipeline_mode=pl.Buffered(1)),              # b1 (resident)
                pl.BlockSpec((1, hidden_dim), const,
                             pipeline_mode=pl.Buffered(1)),              # w2 row (resident)
                pl.BlockSpec(memory_space=pltpu.MemorySpace.SMEM),       # b2 scalar
            ],
            out_specs=pl.BlockSpec((1, tile_b), lambda i: (0, i)),       # lane-dense row
        ),
        compiler_params=pltpu.CompilerParams(
            dimension_semantics=("parallel",),
            vmem_limit_bytes=vmem_limit,
        ),
        cost_estimate=cost,
    )(x, w1_t, b1, w2_row, b2)

    # (1, B) lane-dense pallas output -> (B, 1) module output (same flat order).
    return out_row.reshape(B, 1)


def init_critic_params(key, input_dim, hidden_dim, dtype=jnp.float32):
    """Deterministic init mimicking nn.Linear's U(-1/sqrt(fan_in), 1/sqrt(fan_in))."""
    k1, k2, k3, k4 = jax.random.split(key, 4)
    bound1 = input_dim ** -0.5
    bound2 = hidden_dim ** -0.5
    # fc1 stored pre-transposed (in, out); fc2 stored as a (1, hidden) row.
    w1_t = jax.random.uniform(k1, (input_dim, hidden_dim), dtype, -bound1, bound1)
    b1 = jax.random.uniform(k2, (1, hidden_dim), dtype, -bound1, bound1)
    w2_row = jax.random.uniform(k3, (1, hidden_dim), dtype, -bound2, bound2)
    b2 = jax.random.uniform(k4, (1, 1), dtype, -bound2, bound2)
    return w1_t, b1, w2_row, b2


if __name__ == "__main__":
    key = jax.random.PRNGKey(0)
    kx, kp = jax.random.split(key)

    B, input_dim, hidden_dim = 64, 16, 32
    x = jax.random.normal(kx, (B, input_dim), jnp.float32)
    w1_t, b1, w2_row, b2 = init_critic_params(kp, input_dim, hidden_dim)

    # One-time (amortized) cast of the resident fc1 weight to the MXU dtype;
    # x itself stays f32 in HBM and is cast inside the kernel.
    w1_mxu = w1_t.astype(jnp.bfloat16)

    value = critic_forward(x, w1_mxu, b1, w2_row, b2)
    value = jax.block_until_ready(value)

    # Pure-JAX f32 reference (same math as the PyTorch module).  Tolerance is
    # loosened because fc1 runs with bf16 operands (f32 accumulation).
    h_ref = jnp.maximum(x @ w1_t + b1, 0.0)
    v_ref = h_ref @ w2_row.T + b2
    assert value.shape == (B, 1)
    assert jnp.allclose(value, v_ref, atol=5e-2, rtol=5e-2), (
        "max abs err", float(jnp.max(jnp.abs(value - v_ref))))

    print("KERNEL_OK")
</pallas_src>

<mosaic_0001>
module attributes {stable_mosaic.version = 11 : i64} {
  func.func @critic_kernel(%arg0: i32, %arg1: memref<64x16xf32, #tpu.memory_space<vmem>>, %arg2: memref<16x32xbf16, #tpu.memory_space<vmem>>, %arg3: memref<1x32xf32, #tpu.memory_space<vmem>>, %arg4: memref<1x32xf32, #tpu.memory_space<vmem>>, %arg5: memref<1x1xf32, #tpu.memory_space<smem>>, %arg6: memref<1x64xf32, #tpu.memory_space<vmem>>) attributes {dimension_semantics = [#tpu.dimension_semantics<parallel>], iteration_bounds = array<i64: 1>, scalar_prefetch = 0 : i64, scratch_operands = 0 : i64, tpu.core_type = #tpu.core_type<tc>, window_params = [{transform_indices = @transform_0, window_bounds = array<i64: 64, 16>}, {pipeline_mode = #tpu.pipeline_mode<synchronous>, transform_indices = @transform_1, window_bounds = array<i64: 16, 32>}, {pipeline_mode = #tpu.pipeline_mode<synchronous>, transform_indices = @transform_2, window_bounds = array<i64: 1, 32>}, {pipeline_mode = #tpu.pipeline_mode<synchronous>, transform_indices = @transform_3, window_bounds = array<i64: 1, 32>}, {transform_indices = @transform_4, window_bounds = array<i64: 1, 1>}, {transform_indices = @transform_5, window_bounds = array<i64: 1, 64>}]} {
    %c0 = arith.constant 0 : index
    %c0_0 = arith.constant 0 : index
    %0 = vector.load %arg1[%c0, %c0_0] : memref<64x16xf32, #tpu.memory_space<vmem>>, vector<64x16xf32>
    %1 = arith.truncf %0 : vector<64x16xf32> to vector<64x16xbf16>
    %c0_1 = arith.constant 0 : index
    %c0_2 = arith.constant 0 : index
    %2 = vector.load %arg2[%c0_1, %c0_2] : memref<16x32xbf16, #tpu.memory_space<vmem>>, vector<16x32xbf16>
    %cst = arith.constant dense<0.000000e+00> : vector<64x32xf32>
    %3 = tpu.matmul %1, %2, %cst {dimension_numbers = #tpu.dot_dimension_numbers<[1], [0], [0], [1], [0, 0, 1, 1], [], []>} : vector<64x16xbf16>, vector<16x32xbf16>, vector<64x32xf32> -> vector<64x32xf32>
    %c0_3 = arith.constant 0 : index
    %c0_4 = arith.constant 0 : index
    %4 = vector.load %arg3[%c0_3, %c0_4] : memref<1x32xf32, #tpu.memory_space<vmem>>, vector<1x32xf32>
    %5 = vector.broadcast %4 : vector<1x32xf32> to vector<64x32xf32>
    %6 = arith.addf %3, %5 : vector<64x32xf32>
    %cst_5 = arith.constant 0.000000e+00 : f32
    %7 = vector.broadcast %cst_5 : f32 to vector<64x32xf32>
    %8 = arith.maximumf %6, %7 : vector<64x32xf32>
    %c0_6 = arith.constant 0 : index
    %c0_7 = arith.constant 0 : index
    %9 = vector.load %arg4[%c0_6, %c0_7] : memref<1x32xf32, #tpu.memory_space<vmem>>, vector<1x32xf32>
    %cst_8 = arith.constant dense<0.000000e+00> : vector<1x64xf32>
    %10 = tpu.matmul %9, %8, %cst_8 {dimension_numbers = #tpu.dot_dimension_numbers<[1], [1], [0], [0], [0, 0, 1, 0], [], []>} : vector<1x32xf32>, vector<64x32xf32>, vector<1x64xf32> -> vector<1x64xf32>
    %c0_9 = arith.constant 0 : index
    %c0_10 = arith.constant 0 : index
    %11 = memref.load %arg5[%c0_9, %c0_10] : memref<1x1xf32, #tpu.memory_space<smem>>
    %12 = vector.broadcast %11 : f32 to vector<1x64xf32>
    %13 = arith.addf %10, %12 : vector<1x64xf32>
    %c0_11 = arith.constant 0 : index
    %c0_12 = arith.constant 0 : index
    %14 = vector.load %arg6[%c0_11, %c0_12] : memref<1x64xf32, #tpu.memory_space<vmem>>, vector<1x64xf32>
    tpu.vector_store %arg6[%c0_11, %c0_12], %13 {strides = array<i32>} : memref<1x64xf32, #tpu.memory_space<vmem>>, vector<1x64xf32>,
    return
  }
  func.func @transform_0(%arg0: i32) -> (i32, i32) {
    %c0_i32 = arith.constant 0 : i32
    %c0_i32_0 = arith.constant 0 : i32
    return %arg0, %c0_i32 : i32, i32
  }
  func.func @transform_1(%arg0: i32) -> (i32, i32) {
    %c0_i32 = arith.constant 0 : i32
    %c0_i32_0 = arith.constant 0 : i32
    %c0_i32_1 = arith.constant 0 : i32
    return %c0_i32, %c0_i32_0 : i32, i32
  }
  func.func @transform_2(%arg0: i32) -> (i32, i32) {
    %c0_i32 = arith.constant 0 : i32
    %c0_i32_0 = arith.constant 0 : i32
    %c0_i32_1 = arith.constant 0 : i32
    return %c0_i32, %c0_i32_0 : i32, i32
  }
  func.func @transform_3(%arg0: i32) -> (i32, i32) {
    %c0_i32 = arith.constant 0 : i32
    %c0_i32_0 = arith.constant 0 : i32
    %c0_i32_1 = arith.constant 0 : i32
    return %c0_i32, %c0_i32_0 : i32, i32
  }
  func.func @transform_4(%arg0: i32) -> (i32, i32) {
    %c0_i32 = arith.constant 0 : i32
    %c0_i32_0 = arith.constant 0 : i32
    %c0_i32_1 = arith.constant 0 : i32
    return %c0_i32, %c0_i32_0 : i32, i32
  }
  func.func @transform_5(%arg0: i32) -> (i32, i32) {
    %c0_i32 = arith.constant 0 : i32
    %c0_i32_0 = arith.constant 0 : i32
    return %c0_i32, %arg0 : i32, i32
  }
}

</mosaic_0001>

<llo_original>
// kernel: tpu_custom_call.1
$region0: #{tpu_custom_call.1}
  #allocation0 [shape = 'u32[]', space=smem, size = 0x4, offset = 0x4, fixed_abs, tag = 'smem constant byte address 0x4 - core index']
  #allocation1 [shape = 'u32[72,128]{1,0:T(1,128)}', space=vmem, size = 0x9000, scoped, tag = 'internal scratch']
  #allocation2 [shape = 'f32[1,1]{1,0:T(1,128)S(6)}', space=smem, size = 0x200, scoped, tag = 'scoped memory for tpu_custom_call.1']
  %s0 = inlined_call_operand.vmem [shape: f32[64,16], index: 0, kind: input, shape index: {}]
  %s1 = inlined_call_operand.vmem [shape: bf16[16,32], index: 1, kind: input, shape index: {}]
  %s2 = inlined_call_operand.vmem [shape: f32[1,32], index: 2, kind: input, shape index: {}]
  %s3 = inlined_call_operand.vmem [shape: f32[1,32], index: 3, kind: input, shape index: {}]
  %s4 = inlined_call_operand.<no memory space> [shape: f32[1,1], index: 4, kind: input, shape index: {}]
  %s5 = inlined_call_operand.hbm [shape: f32[1,64], index: 5, kind: output, shape index: {}]
  %s6 = sld [smem:[#allocation0]]
  $region30: #{tpu_custom_call.1} parent=0
    _
  %s8 = ssub.s32 1, %s6
  %s9 = scalar_select 0, %s8, %s6
  %10 = sst [smem:[#allocation2]] %s4
  $region1: #{tpu_custom_call.1} parent=0
    #allocation3 [shape = 'u8[512]{0}', space=vmem, size = 0x400, scoped, tag = 'output window, operand 0, single buffered']
    #allocation4 [shape = 's32[1]{0}', space=sflag, size = 0x4, scoped, tag = 'scoped memory for tpu_custom_call.1']
    %11 = vsyncpa [#allocation4], 0
    // Predicated region
    $region2: #{tpu_custom_call.1} parent=1 // pred_check
      _
    $region3: #{tpu_custom_call.1} parent=1 // pred_check_branch
      %13 = sbr.rel (0) target = $region5
    $region4: #{tpu_custom_call.1} parent=1 // pred_region
      _
    $region5: #{tpu_custom_call.1} parent=1 // pred_fallthru
      _
    // Predicated region
    $region6: #{tpu_custom_call.1} parent=1 // pred_check
      _
    $region7: #{tpu_custom_call.1} parent=1 // pred_check_branch
      %15 = sbr.rel (0) target = $region9
    $region8: #{tpu_custom_call.1} parent=1 // pred_region
      _
    $region9: #{tpu_custom_call.1} parent=1 // pred_fallthru
      _
    // Predicated region
    $region10: #{tpu_custom_call.1} parent=1 // pred_check
      _
    $region11: #{tpu_custom_call.1} parent=1 // pred_check_branch
      %17 = sbr.rel (0) target = $region13
    $region12: #{tpu_custom_call.1} parent=1 // pred_region
      _
    $region13: #{tpu_custom_call.1} parent=1 // pred_fallthru
      _
    // Predicated region
    $region14: #{tpu_custom_call.1} parent=1 // pred_check
      _
    $region15: #{tpu_custom_call.1} parent=1 // pred_check_branch
      %19 = sbr.rel (0) target = $region17
    $region16: #{tpu_custom_call.1} parent=1 // pred_region
      _
    $region17: #{tpu_custom_call.1} parent=1 // pred_fallthru
      _
    // Predicated region
    $region18: #{tpu_custom_call.1} parent=1 // pred_check
      _
    $region19: #{tpu_custom_call.1} parent=1 // pred_check_branch
      %21 = sbr.rel (0) target = $region21
    $region20: #{tpu_custom_call.1} parent=1 // pred_region
      _
    $region21: #{tpu_custom_call.1} parent=1 // pred_fallthru
      _
    %v23 = vld [vmem:[%s0] sm:$0xff]
    %v24 = vld [vmem:[%s0 + $0x8] sm:$0xff]
    %v25 = vld [vmem:[%s0 + $0x10] sm:$0xff]
    %v26 = vld [vmem:[%s0 + $0x18] sm:$0xff]
    %v27 = vld [vmem:[%s0 + $0x20] sm:$0xff]
    %v28 = vld [vmem:[%s0 + $0x28] sm:$0xff]
    %v29 = vld [vmem:[%s0 + $0x30] sm:$0xff]
    %v30 = vld [vmem:[%s0 + $0x38] sm:$0xff]
    %v31 = vpack.c.bf16 %v24, %v23
    %v32 = vpack.c.bf16 %v26, %v25
    %v33 = vpack.c.bf16 %v28, %v27
    %v34 = vpack.c.bf16 %v30, %v29
    %v35 = vld [vmem:[%s1] sm:$0xf]
    %v36 = vld [vmem:[%s1 + $0x4] sm:$0xf]
    %v37 = vld [vmem:[%s2] sm:$0x1]
    %v39 = vperm.slane %v37, 0
    %v43 = vunpack.c.l.b16 %v35
    %v44 = vunpack.c.l.b16 %v36
    %v45 = vpack.c.b16 %v44, %v43
    %vm47 = vcmask 130048
    %v49 = vsel %vm47, %v31, 0
    %v52 = vsel %vm47, %v32, 0
    %v55 = vsel %vm47, %v33, 0
    %v58 = vsel %vm47, %v34, 0
    %60 = vmatpush.bf16.msra.mxu0 0
    %61 = vmatpush.bf16.msra.mxu0 0
    %62 = vmatpush.bf16.msra.mxu0 0
    %63 = vmatpush.bf16.msra.mxu0 0
    %64 = vmatpush.bf16.msra.mxu0 0
    %65 = vmatpush.bf16.msra.mxu0 0
    %66 = vmatpush.bf16.msra.mxu0 0
    %67 = vmatpush.bf16.msra.mxu0 %v45
    %68 = vmatmul.bf16.gmra.mxu0 %v49
    %v69 = vpop.f32.mrf.mxu0
    %v70 = vadd.f32 %v39, %v69
    %v71 = vpop.f32.mrf.mxu0
    %v72 = vadd.f32 %v39, %v71
    %73 = vmatmul.bf16.gmra.mxu0 %v52
    %v74 = vpop.f32.mrf.mxu0
    %v75 = vadd.f32 %v39, %v74
    %v76 = vpop.f32.mrf.mxu0
    %v77 = vadd.f32 %v39, %v76
    %78 = vmatmul.bf16.gmra.mxu0 %v55
    %v79 = vpop.f32.mrf.mxu0
    %v80 = vadd.f32 %v39, %v79
    %v81 = vpop.f32.mrf.mxu0
    %v82 = vadd.f32 %v39, %v81
    %83 = vmatmul.bf16.gmra.mxu0 %v58
    %v84 = vpop.f32.mrf.mxu0
    %v85 = vadd.f32 %v39, %v84
    %v86 = vpop.f32.mrf.mxu0
    %v87 = vadd.f32 %v39, %v86
    %88 = vdwg.mxu0
    %v89 = vmax.f32 %v70, 0.0
    %v90 = vmax.f32 %v72, 0.0
    %v91 = vmax.f32 %v75, 0.0
    %v92 = vmax.f32 %v77, 0.0
    %v93 = vmax.f32 %v80, 0.0
    %v94 = vmax.f32 %v82, 0.0
    %v95 = vmax.f32 %v85, 0.0
    %v96 = vmax.f32 %v87, 0.0
    %v97 = vld [vmem:[%s3] sm:$0x1]
    %s98 = sld [smem:[#allocation2]]
    %v99 = vstv %s98
    %vm100 = vcmask 261120
    %v102 = vsel %vm100, %v97, 0
    %v105 = vsel %vm100, %v89, 0
    %v108 = vsel %vm100, %v90, 0
    %v111 = vsel %vm100, %v91, 0
    %v114 = vsel %vm100, %v92, 0
    %v117 = vsel %vm100, %v93, 0
    %v120 = vsel %vm100, %v94, 0
    %v123 = vsel %vm100, %v95, 0
    %v126 = vsel %vm100, %v96, 0
    %128 = vmatpush.xpose.msra.mxu0 0.0
    %129 = vmatpush.xpose.msra.mxu0 0.0
    %130 = vmatpush.xpose.msra.mxu0 0.0
    %131 = vmatpush.xpose.msra.mxu0 0.0
    %132 = vmatpush.xpose.msra.mxu0 0.0
    %133 = vmatpush.xpose.msra.mxu0 0.0
    %134 = vmatpush.xpose.msra.mxu0 0.0
    %135 = vmatpush.xpose.msra.mxu0 0.0
    %136 = vmatpush.xpose.msra.mxu0 %v126
    %137 = vmatpush.xpose.msra.mxu0 %v123
    %138 = vmatpush.xpose.msra.mxu0 %v120
    %139 = vmatpush.xpose.msra.mxu0 %v117
    %140 = vmatpush.xpose.msra.mxu0 %v114
    %141 = vmatpush.xpose.msra.mxu0 %v111
    %142 = vmatpush.xpose.msra.mxu0 %v108
    %143 = vmatpush.xpose.msra.mxu0 %v105
    %144 = vmatmul.f32.gmra.mxu0 %v102
    %v145 = vpop.f32.mrf.mxu0
    %v146 = vadd.f32 %v99, %v145
    %147 = vdwg.mxu0
    %vm148 = vcmask 516096
    %149 = vst.msk [vmem:[#allocation3] sm:$0x1] %vm148, %v146
    // Predicated region
    $region22: #{tpu_custom_call.1} parent=1 // pred_check
      _
    $region23: #{tpu_custom_call.1} parent=1 // pred_check_branch
      %151 = sbr.rel (0) target = $region25
    $region24: #{tpu_custom_call.1} parent=1 // pred_region
      %153 = vsyncadd [#allocation4], 0
      %s155 = sshll.u32 [#allocation3], 4
      %s156 = int_to_ptr.vmem [resolvable:$true] %s155
      %s157 = sshll.u32 %s5, 4
      %s158 = int_to_ptr.hbm [resolvable:$true] %s157
      %160 = dma.vmem_to_hbm [thread:$0]  %s156, 16, %s158, [#allocation4]
    $region25: #{tpu_custom_call.1} parent=1 // pred_fallthru
      _
    // Predicated region
    $region26: #{tpu_custom_call.1} parent=1 // pred_check
      _
    $region27: #{tpu_custom_call.1} parent=1 // pred_check_branch
      %162 = sbr.rel (0) target = $region29
    $region28: #{tpu_custom_call.1} parent=1 // pred_region
      %164 = dma.done [#allocation4], 16
    $region29: #{tpu_custom_call.1} parent=1 // pred_fallthru
      _
    %165 = vsyncpa [#allocation4], 1

</llo_original>
